<compile_context>
chip_gen: v7x
topology: tpu7x:2x2x1
jax: 0.10.0
libtpu: 0.0.40
codegen_flags: <defaults>
</compile_context>

<pallas_src>
import functools

import jax
import jax.numpy as jnp
from jax.experimental import pallas as pl
from jax.experimental.pallas import tpu as pltpu


def _gather_kernel(ids_ref, table_hbm, out_ref, copy_sem, *, tile_n, unroll):
    # ids_ref:   (n_pad,)     int32, SMEM (scalar prefetch)
    # table_hbm: (V, D)       embedding table left in HBM (pl.ANY)
    # out_ref:   (tile_n, D)  VMEM output tile -- gather DMAs land here directly
    # copy_sem:  ()           shared DMA semaphore (byte-accounted)
    base = pl.multiple_of(pl.program_id(0) * tile_n, tile_n)

    # Issue one row-sized HBM->VMEM DMA per token, straight into the output
    # tile.  `unroll` descriptors are set up per loop iteration so the two
    # scalar slots + misc slot can overlap address math with DMA issue.
    @pl.loop(0, tile_n // unroll)
    def _start(g):
        j0 = pl.multiple_of(g * unroll, unroll)
        for u in range(unroll):
            j = j0 + u
            tok = ids_ref[base + j]
            pltpu.make_async_copy(
                table_hbm.at[pl.ds(tok, 1), :],
                out_ref.at[pl.ds(j, 1), :],
                copy_sem,
            ).start()

    # One aggregated wait for all tile_n row copies: DMA semaphores count bytes,
    # so a single (tile_n, D)-sized descriptor accounts for every (1, D) row
    # issued above (all rows share shape/dtype, so byte accounting is exact).
    # All gather DMAs are complete before the body returns, so the output
    # pipeline writeback cannot race the in-flight copies.
    pltpu.make_async_copy(
        table_hbm.at[pl.ds(0, tile_n), :],
        out_ref,
        copy_sem,
    ).wait()


def vocab_embedding_forward(x, table, *, tile_n=512, unroll=8):
    """x: int [batch, seq]; table: [vocab, dim] -> [batch, seq, dim] (nn.Embedding)."""
    batch, seq = x.shape
    vocab, dim = table.shape

    n = batch * seq
    # Clamp ids: PyTorch nn.Embedding errors on OOB ids; here an OOB id would be
    # an unchecked OOB DMA, so clamp defensively (documented semantics change).
    ids_flat = jnp.clip(x.reshape(n).astype(jnp.int32), 0, vocab - 1)

    # Keep the aggregated-wait descriptor (first tile_n table rows) in-bounds and
    # keep tile_n a multiple of the sublane tile / unroll factor.
    if vocab < tile_n:
        tile_n = max(8, (vocab // 8) * 8)
    tile_n = max(unroll, (tile_n // unroll) * unroll)

    # Pad token count up to a multiple of the tile size; pad tokens gather row 0
    # and the padded rows are sliced off afterwards.
    # TODO(synk): guard the padded tail (skip DMAs for pad slots) -- needs a
    # dynamically sized wait, so the uniform aggregated wait is kept instead.
    # TODO(synk): optional small-table fast path (table resident in VMEM via a
    # full-array BlockSpec) for v5e/v6e; the HBM gather is kept as the single
    # path since it works at every vocab size and is required on v7x.
    n_pad = ((n + tile_n - 1) // tile_n) * tile_n
    if n_pad != n:
        ids_flat = jnp.pad(ids_flat, (0, n_pad - n))

    grid = (n_pad // tile_n,)

    out = pl.pallas_call(
        functools.partial(_gather_kernel, tile_n=tile_n, unroll=unroll),
        out_shape=jax.ShapeDtypeStruct((n_pad, dim), table.dtype),
        grid_spec=pltpu.PrefetchScalarGridSpec(
            num_scalar_prefetch=1,                         # ids -> SMEM
            grid=grid,
            in_specs=[pl.BlockSpec(memory_space=pl.ANY)],  # table stays in HBM
            out_specs=pl.BlockSpec((tile_n, dim), lambda i, ids: (i, 0)),
            scratch_shapes=[pltpu.SemaphoreType.DMA(())],
        ),
        compiler_params=pltpu.CompilerParams(
            dimension_semantics=("parallel",),   # token tiles shard across TCs (v7x)
            vmem_limit_bytes=32 * 1024 * 1024,   # headroom for large D (double-buffered out)
        ),
    )(ids_flat, table)

    return out[:n].reshape(batch, seq, dim)


if __name__ == "__main__":
    # Deterministic synthetic parameters (Vocab(...) -> vocab_size V; nn.Embedding(V, D)).
    # D chosen as a multiple of 128 so output stores are lane-dense (real VisualBERT D=768).
    # TODO(synk): Vocab(**vocab_params) vocabulary construction / pretrained-vector loading
    # is host-side setup, not a kernel op; only the embedding lookup is implemented.
    vocab_size = 512
    embedding_dim = 256
    batch, seq = 2, 8

    key = jax.random.PRNGKey(0)
    k_tab, k_ids = jax.random.split(key)

    # nn.Embedding default init ~ N(0, 1)
    table = jax.random.normal(k_tab, (vocab_size, embedding_dim), dtype=jnp.float32)
    x = jax.random.randint(k_ids, (batch, seq), 0, vocab_size, dtype=jnp.int32)

    out = vocab_embedding_forward(x, table)
    out = jax.block_until_ready(out)

    # Reference check against plain JAX gather (same semantics as torch nn.Embedding).
    ref = table[x]
    assert out.shape == (batch, seq, embedding_dim)
    assert jnp.allclose(out, ref, atol=1e-6), "mismatch vs reference gather"

    print("KERNEL_OK")
</pallas_src>

<mosaic_0001>
module attributes {stable_mosaic.version = 11 : i64} {
  func.func @_gather_kernel(%arg0: i32, %arg1: memref<512xi32, #tpu.memory_space<smem>>, %arg2: memref<512x256xf32, #tpu.memory_space<any>>, %arg3: memref<512x256xf32, #tpu.memory_space<vmem>>, %arg4: memref<!tpu.dma_semaphore, #tpu.memory_space<semaphore_mem>>) attributes {dimension_semantics = [#tpu.dimension_semantics<parallel>], iteration_bounds = array<i64: 1>, scalar_prefetch = 1 : i64, scratch_operands = 1 : i64, tpu.core_type = #tpu.core_type<tc>, window_params = [{}, {transform_indices = @transform_1, window_bounds = array<i64: 512, 256>}]} {
    %c512_i32 = arith.constant 512 : i32
    %0 = arith.muli %arg0, %c512_i32 : i32
    %1 = tpu.assume_multiple %0, 512 : i32
    %c0_i32 = arith.constant 0 : i32
    %c64_i32 = arith.constant 64 : i32
    %2 = arith.addi %c0_i32, %c64_i32 : i32
    %c1_i32 = arith.constant 1 : i32
    scf.for %arg5 = %c0_i32 to %2 step %c1_i32  : i32 {
      %c1_i32_3 = arith.constant 1 : i32
      %4 = arith.muli %arg5, %c1_i32_3 : i32
      %c0_i32_4 = arith.constant 0 : i32
      %5 = arith.addi %c0_i32_4, %4 : i32
      %c8_i32 = arith.constant 8 : i32
      %6 = arith.muli %5, %c8_i32 : i32
      %7 = tpu.assume_multiple %6, 8 : i32
      %c0_i32_5 = arith.constant 0 : i32
      %8 = arith.addi %7, %c0_i32_5 : i32
      %9 = arith.addi %1, %8 : i32
      %10 = arith.index_cast %9 : i32 to index
      %11 = memref.load %arg1[%10] : memref<512xi32, #tpu.memory_space<smem>>
      %c0_i32_6 = arith.constant 0 : i32
      %12 = tpu.memref_slice %arg2[%11, %c0_i32_6] : memref<512x256xf32, #tpu.memory_space<any>> -> memref<1x256xf32, #tpu.memory_space<any>>
      %c0_i32_7 = arith.constant 0 : i32
      %13 = tpu.memref_slice %arg3[%8, %c0_i32_7] : memref<512x256xf32, #tpu.memory_space<vmem>> -> memref<1x256xf32, #tpu.memory_space<vmem>>
      tpu.enqueue_dma source(%12 : memref<1x256xf32, #tpu.memory_space<any>>) target(%13 : memref<1x256xf32, #tpu.memory_space<vmem>>) target_semaphore(%arg4 : memref<!tpu.dma_semaphore, #tpu.memory_space<semaphore_mem>>)
      %c1_i32_8 = arith.constant 1 : i32
      %14 = arith.addi %7, %c1_i32_8 : i32
      %15 = arith.addi %1, %14 : i32
      %16 = arith.index_cast %15 : i32 to index
      %17 = memref.load %arg1[%16] : memref<512xi32, #tpu.memory_space<smem>>
      %c0_i32_9 = arith.constant 0 : i32
      %18 = tpu.memref_slice %arg2[%17, %c0_i32_9] : memref<512x256xf32, #tpu.memory_space<any>> -> memref<1x256xf32, #tpu.memory_space<any>>
      %c0_i32_10 = arith.constant 0 : i32
      %19 = tpu.memref_slice %arg3[%14, %c0_i32_10] : memref<512x256xf32, #tpu.memory_space<vmem>> -> memref<1x256xf32, #tpu.memory_space<vmem>>
      tpu.enqueue_dma source(%18 : memref<1x256xf32, #tpu.memory_space<any>>) target(%19 : memref<1x256xf32, #tpu.memory_space<vmem>>) target_semaphore(%arg4 : memref<!tpu.dma_semaphore, #tpu.memory_space<semaphore_mem>>)
      %c2_i32 = arith.constant 2 : i32
      %20 = arith.addi %7, %c2_i32 : i32
      %21 = arith.addi %1, %20 : i32
      %22 = arith.index_cast %21 : i32 to index
      %23 = memref.load %arg1[%22] : memref<512xi32, #tpu.memory_space<smem>>
      %c0_i32_11 = arith.constant 0 : i32
      %24 = tpu.memref_slice %arg2[%23, %c0_i32_11] : memref<512x256xf32, #tpu.memory_space<any>> -> memref<1x256xf32, #tpu.memory_space<any>>
      %c0_i32_12 = arith.constant 0 : i32
      %25 = tpu.memref_slice %arg3[%20, %c0_i32_12] : memref<512x256xf32, #tpu.memory_space<vmem>> -> memref<1x256xf32, #tpu.memory_space<vmem>>
      tpu.enqueue_dma source(%24 : memref<1x256xf32, #tpu.memory_space<any>>) target(%25 : memref<1x256xf32, #tpu.memory_space<vmem>>) target_semaphore(%arg4 : memref<!tpu.dma_semaphore, #tpu.memory_space<semaphore_mem>>)
      %c3_i32 = arith.constant 3 : i32
      %26 = arith.addi %7, %c3_i32 : i32
      %27 = arith.addi %1, %26 : i32
      %28 = arith.index_cast %27 : i32 to index
      %29 = memref.load %arg1[%28] : memref<512xi32, #tpu.memory_space<smem>>
      %c0_i32_13 = arith.constant 0 : i32
      %30 = tpu.memref_slice %arg2[%29, %c0_i32_13] : memref<512x256xf32, #tpu.memory_space<any>> -> memref<1x256xf32, #tpu.memory_space<any>>
      %c0_i32_14 = arith.constant 0 : i32
      %31 = tpu.memref_slice %arg3[%26, %c0_i32_14] : memref<512x256xf32, #tpu.memory_space<vmem>> -> memref<1x256xf32, #tpu.memory_space<vmem>>
      tpu.enqueue_dma source(%30 : memref<1x256xf32, #tpu.memory_space<any>>) target(%31 : memref<1x256xf32, #tpu.memory_space<vmem>>) target_semaphore(%arg4 : memref<!tpu.dma_semaphore, #tpu.memory_space<semaphore_mem>>)
      %c4_i32 = arith.constant 4 : i32
      %32 = arith.addi %7, %c4_i32 : i32
      %33 = arith.addi %1, %32 : i32
      %34 = arith.index_cast %33 : i32 to index
      %35 = memref.load %arg1[%34] : memref<512xi32, #tpu.memory_space<smem>>
      %c0_i32_15 = arith.constant 0 : i32
      %36 = tpu.memref_slice %arg2[%35, %c0_i32_15] : memref<512x256xf32, #tpu.memory_space<any>> -> memref<1x256xf32, #tpu.memory_space<any>>
      %c0_i32_16 = arith.constant 0 : i32
      %37 = tpu.memref_slice %arg3[%32, %c0_i32_16] : memref<512x256xf32, #tpu.memory_space<vmem>> -> memref<1x256xf32, #tpu.memory_space<vmem>>
      tpu.enqueue_dma source(%36 : memref<1x256xf32, #tpu.memory_space<any>>) target(%37 : memref<1x256xf32, #tpu.memory_space<vmem>>) target_semaphore(%arg4 : memref<!tpu.dma_semaphore, #tpu.memory_space<semaphore_mem>>)
      %c5_i32 = arith.constant 5 : i32
      %38 = arith.addi %7, %c5_i32 : i32
      %39 = arith.addi %1, %38 : i32
      %40 = arith.index_cast %39 : i32 to index
      %41 = memref.load %arg1[%40] : memref<512xi32, #tpu.memory_space<smem>>
      %c0_i32_17 = arith.constant 0 : i32
      %42 = tpu.memref_slice %arg2[%41, %c0_i32_17] : memref<512x256xf32, #tpu.memory_space<any>> -> memref<1x256xf32, #tpu.memory_space<any>>
      %c0_i32_18 = arith.constant 0 : i32
      %43 = tpu.memref_slice %arg3[%38, %c0_i32_18] : memref<512x256xf32, #tpu.memory_space<vmem>> -> memref<1x256xf32, #tpu.memory_space<vmem>>
      tpu.enqueue_dma source(%42 : memref<1x256xf32, #tpu.memory_space<any>>) target(%43 : memref<1x256xf32, #tpu.memory_space<vmem>>) target_semaphore(%arg4 : memref<!tpu.dma_semaphore, #tpu.memory_space<semaphore_mem>>)
      %c6_i32 = arith.constant 6 : i32
      %44 = arith.addi %7, %c6_i32 : i32
      %45 = arith.addi %1, %44 : i32
      %46 = arith.index_cast %45 : i32 to index
      %47 = memref.load %arg1[%46] : memref<512xi32, #tpu.memory_space<smem>>
      %c0_i32_19 = arith.constant 0 : i32
      %48 = tpu.memref_slice %arg2[%47, %c0_i32_19] : memref<512x256xf32, #tpu.memory_space<any>> -> memref<1x256xf32, #tpu.memory_space<any>>
      %c0_i32_20 = arith.constant 0 : i32
      %49 = tpu.memref_slice %arg3[%44, %c0_i32_20] : memref<512x256xf32, #tpu.memory_space<vmem>> -> memref<1x256xf32, #tpu.memory_space<vmem>>
      tpu.enqueue_dma source(%48 : memref<1x256xf32, #tpu.memory_space<any>>) target(%49 : memref<1x256xf32, #tpu.memory_space<vmem>>) target_semaphore(%arg4 : memref<!tpu.dma_semaphore, #tpu.memory_space<semaphore_mem>>)
      %c7_i32 = arith.constant 7 : i32
      %50 = arith.addi %7, %c7_i32 : i32
      %51 = arith.addi %1, %50 : i32
      %52 = arith.index_cast %51 : i32 to index
      %53 = memref.load %arg1[%52] : memref<512xi32, #tpu.memory_space<smem>>
      %c0_i32_21 = arith.constant 0 : i32
      %54 = tpu.memref_slice %arg2[%53, %c0_i32_21] : memref<512x256xf32, #tpu.memory_space<any>> -> memref<1x256xf32, #tpu.memory_space<any>>
      %c0_i32_22 = arith.constant 0 : i32
      %55 = tpu.memref_slice %arg3[%50, %c0_i32_22] : memref<512x256xf32, #tpu.memory_space<vmem>> -> memref<1x256xf32, #tpu.memory_space<vmem>>
      tpu.enqueue_dma source(%54 : memref<1x256xf32, #tpu.memory_space<any>>) target(%55 : memref<1x256xf32, #tpu.memory_space<vmem>>) target_semaphore(%arg4 : memref<!tpu.dma_semaphore, #tpu.memory_space<semaphore_mem>>)
    }
    %c64_i32_0 = arith.constant 64 : i32
    %c0_i32_1 = arith.constant 0 : i32
    %c0_i32_2 = arith.constant 0 : i32
    %3 = tpu.memref_slice %arg2[%c0_i32_1, %c0_i32_2] : memref<512x256xf32, #tpu.memory_space<any>> -> memref<512x256xf32, #tpu.memory_space<any>>
    tpu.wait_dma2 semaphore(%arg4 : memref<!tpu.dma_semaphore, #tpu.memory_space<semaphore_mem>>) src(%3 : memref<512x256xf32, #tpu.memory_space<any>>) dst(%arg3 : memref<512x256xf32, #tpu.memory_space<vmem>>)
    return
  }
  func.func @transform_1(%arg0: i32, %arg1: memref<512xi32, #tpu.memory_space<smem>>) -> (i32, i32) {
    %c0_i32 = arith.constant 0 : i32
    %c0_i32_0 = arith.constant 0 : i32
    return %arg0, %c0_i32 : i32, i32
  }
}

</mosaic_0001>

<llo_original>
// kernel: tpu_custom_call.1
$region0: #{tpu_custom_call.1}
  #allocation0 [shape = 'u32[]', space=smem, size = 0x4, offset = 0x4, fixed_abs, tag = 'smem constant byte address 0x4 - core index']
  #allocation1 [shape = 'u32[144,128]{1,0:T(1,128)}', space=vmem, size = 0x12000, scoped, tag = 'internal scratch']
  #allocation2 [shape = 's32[1]{0}', space=sflag, size = 0x4, scoped, tag = 'scratch operand']
  #allocation3 [shape = 's32[1]{0}', space=sflag, size = 0x4, scoped, tag = 'scoped memory for tpu_custom_call.1']
  #allocation4 [shape = 'u8[2048]{0}', space=smem, size = 0x800, scoped, tag = 'prefetched SMEM operand 0']
  #allocation7 [shape = 's32[]', space=sflag, size = 0x4, offset = 0, fixed_abs, tag = 'sflag constant byte address 0x0 - dummy sync flag']
  #allocation8 [shape = 's32[]', space=sflag, size = 0x4, offset = 0, fixed_abs, tag = 'sflag constant byte address 0x0 - dummy sync flag']
  #allocation9 [shape = 's32[]', space=sflag, size = 0x4, offset = 0, fixed_abs, tag = 'sflag constant byte address 0x0 - dummy sync flag']
  #allocation10 [shape = 's32[]', space=sflag, size = 0x4, offset = 0, fixed_abs, tag = 'sflag constant byte address 0x0 - dummy sync flag']
  #allocation11 [shape = 's32[]', space=sflag, size = 0x4, offset = 0, fixed_abs, tag = 'sflag constant byte address 0x0 - dummy sync flag']
  #allocation12 [shape = 's32[]', space=sflag, size = 0x4, offset = 0, fixed_abs, tag = 'sflag constant byte address 0x0 - dummy sync flag']
  #allocation13 [shape = 's32[]', space=sflag, size = 0x4, offset = 0, fixed_abs, tag = 'sflag constant byte address 0x0 - dummy sync flag']
  #allocation14 [shape = 's32[]', space=sflag, size = 0x4, offset = 0, fixed_abs, tag = 'sflag constant byte address 0x0 - dummy sync flag']
  %s0 = inlined_call_operand.hbm [shape: s32[512], index: 0, kind: input, shape index: {}]
  %s1 = inlined_call_operand.hbm [shape: f32[512,256], index: 1, kind: input, shape index: {}]
  %s2 = inlined_call_operand.hbm [shape: f32[512,256], index: 2, kind: output, shape index: {}]
  %s3 = sld [smem:[#allocation0]]
  $region17: #{tpu_custom_call.1} parent=0
    _
  %s5 = ssub.s32 1, %s3
  %s6 = scalar_select 0, %s5, %s3
  %8 = dma.hbm_to_smem %s0, 64, [#allocation4], [#allocation3]
  %9 = dma.done [#allocation3], 64
  %10 = sfence
  $region1: #{tpu_custom_call.1} parent=0
    #allocation5 [shape = 'u8[524288]{0}', space=vmem, size = 0x80000, scoped, tag = 'output window, operand 0, single buffered']
    #allocation6 [shape = 's32[1]{0}', space=sflag, size = 0x4, scoped, tag = 'scoped memory for tpu_custom_call.1']
    %11 = vsyncpa [#allocation6], 0
    %s12 = smul.u32 0, 512
    loop: start=0, step=1, limit=64
    $region2: #{tpu_custom_call.1} parent=1 // loop_pre_header
      _
    $region3: #{tpu_custom_call.1} parent=1 // loop_header
      %s14 = sphi 0, %s18
      %p15 = scmp.ge.s32.totalorder %s14, 64
    $region4: #{tpu_custom_call.1} parent=1 // loop_header_branch
      %17 = sbr.rel (%p15) target = $region8
    $region5: #{tpu_custom_call.1} parent=1 // loop_body
      %s19 = smul.u32 %s14, 8
      %s20 = sadd.s32 %s12, %s19
      %s21 = sld [smem:[#allocation4 + %s20]]
      %s22 = sshrl.u32 %s21, 3
      %s23 = sand.u32 %s21, 7
      %s24 = smul.u32 %s22, 16
      %s25 = sadd.s32 %s23, %s24
      %s26 = smul.addr %s25, 16
      %s27 = scalar_lea.hbm %s1, %s26
      %s28 = sshrl.u32 %s19, 3
      %s29 = sand.u32 %s19, 7
      %s30 = smul.u32 %s28, 16
      %s31 = sadd.s32 %s29, %s30
      %s32 = scalar_lea.vmem [#allocation5], %s31
      %s34 = sshll.u32 %s32, 4
      %s35 = int_to_ptr.vmem [resolvable:$true] %s34
      %37 = dma.hbm_to_vmem [thread:$0]  %s27, 32, %s35, [#allocation2], 128, 128, 1
      %s38 = sadd.s32 %s19, 1
      %s39 = sadd.s32 %s12, %s38
      %s40 = sld [smem:[#allocation4 + %s39]]
      %s41 = sshrl.u32 %s40, 3
      %s42 = sand.u32 %s40, 7
      %s43 = smul.u32 %s41, 16
      %s44 = sadd.s32 %s42, %s43
      %s45 = smul.addr %s44, 16
      %s46 = scalar_lea.hbm %s1, %s45
      %s47 = sshrl.u32 %s38, 3
      %s48 = sand.u32 %s38, 7
      %s49 = smul.u32 %s47, 16
      %s50 = sadd.s32 %s48, %s49
      %s51 = scalar_lea.vmem [#allocation5], %s50
      %s53 = sshll.u32 %s51, 4
      %s54 = int_to_ptr.vmem [resolvable:$true] %s53
      %56 = dma.hbm_to_vmem [thread:$0]  %s46, 32, %s54, [#allocation2], 128, 128, 1
      %s57 = sadd.s32 %s19, 2
      %s58 = sadd.s32 %s12, %s57
      %s59 = sld [smem:[#allocation4 + %s58]]
      %s60 = sshrl.u32 %s59, 3
      %s61 = sand.u32 %s59, 7
      %s62 = smul.u32 %s60, 16
      %s63 = sadd.s32 %s61, %s62
      %s64 = smul.addr %s63, 16
      %s65 = scalar_lea.hbm %s1, %s64
      %s66 = sshrl.u32 %s57, 3
      %s67 = sand.u32 %s57, 7
      %s68 = smul.u32 %s66, 16
      %s69 = sadd.s32 %s67, %s68
      %s70 = scalar_lea.vmem [#allocation5], %s69
      %s72 = sshll.u32 %s70, 4
      %s73 = int_to_ptr.vmem [resolvable:$true] %s72
      %75 = dma.hbm_to_vmem [thread:$0]  %s65, 32, %s73, [#allocation2], 128, 128, 1
      %s76 = sadd.s32 %s19, 3
      %s77 = sadd.s32 %s12, %s76
      %s78 = sld [smem:[#allocation4 + %s77]]
      %s79 = sshrl.u32 %s78, 3
      %s80 = sand.u32 %s78, 7
      %s81 = smul.u32 %s79, 16
      %s82 = sadd.s32 %s80, %s81
      %s83 = smul.addr %s82, 16
      %s84 = scalar_lea.hbm %s1, %s83
      %s85 = sshrl.u32 %s76, 3
      %s86 = sand.u32 %s76, 7
      %s87 = smul.u32 %s85, 16
      %s88 = sadd.s32 %s86, %s87
      %s89 = scalar_lea.vmem [#allocation5], %s88
      %s91 = sshll.u32 %s89, 4
      %s92 = int_to_ptr.vmem [resolvable:$true] %s91
      %94 = dma.hbm_to_vmem [thread:$0]  %s84, 32, %s92, [#allocation2], 128, 128, 1
      %s95 = sadd.s32 %s19, 4
      %s96 = sadd.s32 %s12, %s95
      %s97 = sld [smem:[#allocation4 + %s96]]
      %s98 = sshrl.u32 %s97, 3
      %s99 = sand.u32 %s97, 7
      %s100 = smul.u32 %s98, 16
      %s101 = sadd.s32 %s99, %s100
      %s102 = smul.addr %s101, 16
      %s103 = scalar_lea.hbm %s1, %s102
      %s104 = sshrl.u32 %s95, 3
      %s105 = sand.u32 %s95, 7
      %s106 = smul.u32 %s104, 16
      %s107 = sadd.s32 %s105, %s106
      %s108 = scalar_lea.vmem [#allocation5], %s107
      %s110 = sshll.u32 %s108, 4
      %s111 = int_to_ptr.vmem [resolvable:$true] %s110
      %113 = dma.hbm_to_vmem [thread:$0]  %s103, 32, %s111, [#allocation2], 128, 128, 1
      %s114 = sadd.s32 %s19, 5
      %s115 = sadd.s32 %s12, %s114
      %s116 = sld [smem:[#allocation4 + %s115]]
      %s117 = sshrl.u32 %s116, 3
      %s118 = sand.u32 %s116, 7
      %s119 = smul.u32 %s117, 16
      %s120 = sadd.s32 %s118, %s119
      %s121 = smul.addr %s120, 16
      %s122 = scalar_lea.hbm %s1, %s121
      %s123 = sshrl.u32 %s114, 3
      %s124 = sand.u32 %s114, 7
      %s125 = smul.u32 %s123, 16
      %s126 = sadd.s32 %s124, %s125
      %s127 = scalar_lea.vmem [#allocation5], %s126
      %s129 = sshll.u32 %s127, 4
      %s130 = int_to_ptr.vmem [resolvable:$true] %s129
      %132 = dma.hbm_to_vmem [thread:$0]  %s122, 32, %s130, [#allocation2], 128, 128, 1
      %s133 = sadd.s32 %s19, 6
      %s134 = sadd.s32 %s12, %s133
      %s135 = sld [smem:[#allocation4 + %s134]]
      %s136 = sshrl.u32 %s135, 3
      %s137 = sand.u32 %s135, 7
      %s138 = smul.u32 %s136, 16
      %s139 = sadd.s32 %s137, %s138
      %s140 = smul.addr %s139, 16
      %s141 = scalar_lea.hbm %s1, %s140
      %s142 = sshrl.u32 %s133, 3
      %s143 = sand.u32 %s133, 7
      %s144 = smul.u32 %s142, 16
      %s145 = sadd.s32 %s143, %s144
      %s146 = scalar_lea.vmem [#allocation5], %s145
      %s148 = sshll.u32 %s146, 4
      %s149 = int_to_ptr.vmem [resolvable:$true] %s148
      %151 = dma.hbm_to_vmem [thread:$0]  %s141, 32, %s149, [#allocation2], 128, 128, 1
      %s152 = sadd.s32 %s19, 7
      %s153 = sadd.s32 %s12, %s152
      %s154 = sld [smem:[#allocation4 + %s153]]
      %s155 = sshrl.u32 %s154, 3
      %s156 = sand.u32 %s154, 7
      %s157 = smul.u32 %s155, 16
      %s158 = sadd.s32 %s156, %s157
      %s159 = smul.addr %s158, 16
      %s160 = scalar_lea.hbm %s1, %s159
      %s161 = sshrl.u32 %s152, 3
      %s162 = sand.u32 %s152, 7
      %s163 = smul.u32 %s161, 16
      %s164 = sadd.s32 %s162, %s163
      %s165 = scalar_lea.vmem [#allocation5], %s164
      %s167 = sshll.u32 %s165, 4
      %s168 = int_to_ptr.vmem [resolvable:$true] %s167
      %170 = dma.hbm_to_vmem [thread:$0]  %s160, 32, %s168, [#allocation2], 128, 128, 1
    $region6: #{tpu_custom_call.1} parent=1 // loop_footer
      %s18 = sadd.s32 1, %s14
    $region7: #{tpu_custom_call.1} parent=1 // loop_footer_branch
      %13 = sbr.rel target = $region3
    $region8: #{tpu_custom_call.1} parent=1 // loop_exit
      _
    %s171 = smul.u32 8, 64
    %s172 = smul.u32 %s171, 2
    %s173 = sshll.u32 %s172, 4
    %174 = dma.done [#allocation2], %s173
    // Predicated region
    $region9: #{tpu_custom_call.1} parent=1 // pred_check
      _
    $region10: #{tpu_custom_call.1} parent=1 // pred_check_branch
      %176 = sbr.rel (0) target = $region12
    $region11: #{tpu_custom_call.1} parent=1 // pred_region
      %s178 = ssub.s32 16384, 16384
      %179 = vsyncadd [#allocation6], %s178
      %s180 = sshll.u32 [#allocation5], 4
      %s181 = int_to_ptr.vmem [resolvable:$true] %s180
      %186 = dma.vmem_to_hbm [thread:$0]  %s181, 16384, %s2, [#allocation6], 256, 256, 16
    $region12: #{tpu_custom_call.1} parent=1 // pred_fallthru
      _
    // Predicated region
    $region13: #{tpu_custom_call.1} parent=1 // pred_check
      _
    $region14: #{tpu_custom_call.1} parent=1 // pred_check_branch
      %188 = sbr.rel (0) target = $region16
    $region15: #{tpu_custom_call.1} parent=1 // pred_region
      %189 = dma.done [#allocation6], 16384
    $region16: #{tpu_custom_call.1} parent=1 // pred_fallthru
      _
    %190 = vsyncpa [#allocation6], 1
  %191 = vsyncmov [#allocation2]
  %s192 = vpop.sfrf %191
  %p193 = scmp.eq.s32.totalorder %s192, 0
  %p194 = pneg %p193
  %196 = shalt.err (%p194)

</llo_original>
